<compile_context>
chip_gen: v5e
topology: v5e:2x2
jax: 0.10.0
libtpu: 0.0.40
codegen_flags: <defaults>
</compile_context>

<pallas_src>
import functools

import jax
import jax.numpy as jnp
from jax.experimental import pallas as pl
from jax.experimental.pallas import tpu as pltpu


def _drc_kernel(x_ref, o_ref, *, multiplier, clip_val):
    x = x_ref[...]
    # torch.clamp(x, min=clip_val) == max(x, clip_val)
    o_ref[...] = jnp.log(jnp.maximum(x, clip_val) * multiplier)


class DynamicRangeCompression:
    """Pallas-TPU implementation of speechbrain's DynamicRangeCompression."""

    def __init__(self, multiplier=1.0, clip_val=1e-5):
        self.multiplier = float(multiplier)
        self.clip_val = float(clip_val)

    def __call__(self, x):
        orig_shape = x.shape
        orig_dtype = x.dtype

        flat = jnp.asarray(x, jnp.float32).reshape(-1)
        n = int(flat.shape[0])

        # Lane-dense layout: wide last dim (multiple of 128), big row tiles.
        lanes = 512 if n >= 512 else 128
        rows = pl.cdiv(n, lanes)
        rows8 = ((rows + 7) // 8) * 8          # sublane alignment
        tile_rows = min(256, rows8)            # up to 256x512 f32 per block
        rows_pad = ((rows8 + tile_rows - 1) // tile_rows) * tile_rows

        pad_amount = rows_pad * lanes - n
        padded = jnp.pad(flat, (0, pad_amount), constant_values=1.0)
        x2d = padded.reshape(rows_pad, lanes)

        kernel = functools.partial(
            _drc_kernel, multiplier=self.multiplier, clip_val=self.clip_val
        )

        out2d = pl.pallas_call(
            kernel,
            out_shape=jax.ShapeDtypeStruct((rows_pad, lanes), jnp.float32),
            grid=(rows_pad // tile_rows,),
            in_specs=[pl.BlockSpec((tile_rows, lanes), lambda i: (i, 0))],
            out_specs=pl.BlockSpec((tile_rows, lanes), lambda i: (i, 0)),
            compiler_params=pltpu.CompilerParams(
                dimension_semantics=("parallel",)
            ),
        )(x2d)

        out = out2d.reshape(-1)[:n].reshape(orig_shape)
        if orig_dtype != jnp.float32:
            out = out.astype(orig_dtype)
        return out


def _reference(x, multiplier=1.0, clip_val=1e-5):
    """Pure-JAX reference for correctness checking."""
    return jnp.log(jnp.maximum(jnp.asarray(x, jnp.float32), clip_val) * multiplier)


if __name__ == "__main__":
    key = jax.random.PRNGKey(0)

    # Main deterministic example (includes negatives / near-zero values so the
    # clamp path is exercised).
    x = jax.random.normal(key, (2, 4, 16, 16), dtype=jnp.float32)

    drc = DynamicRangeCompression()
    out = jax.block_until_ready(drc(x))
    assert out.shape == x.shape, out.shape
    ref = _reference(x)
    assert bool(jnp.allclose(out, ref, atol=1e-5, rtol=1e-5)), float(
        jnp.max(jnp.abs(out - ref))
    )

    # Docstring examples from the PyTorch module.
    xd = jnp.array([10.0, 20.0, 0.0, 30.0], dtype=jnp.float32)
    out1 = jax.block_until_ready(DynamicRangeCompression()(xd))
    exp1 = jnp.array([2.3026, 2.9957, -11.5129, 3.4012], dtype=jnp.float32)
    assert bool(jnp.allclose(out1, exp1, atol=1e-3)), out1

    out2 = jax.block_until_ready(DynamicRangeCompression(2.0)(xd))
    exp2 = jnp.array([2.9957, 3.6889, -10.8198, 4.0943], dtype=jnp.float32)
    assert bool(jnp.allclose(out2, exp2, atol=1e-3)), out2

    # Larger audio-like input to exercise a multi-step grid (multiple row tiles).
    xa = jnp.abs(jax.random.normal(jax.random.PRNGKey(1), (2, 160000), jnp.float32))
    outa = jax.block_until_ready(drc(xa))
    refa = _reference(xa)
    assert outa.shape == xa.shape
    assert bool(jnp.allclose(outa, refa, atol=1e-5, rtol=1e-5)), float(
        jnp.max(jnp.abs(outa - refa))
    )

    print("KERNEL_OK")
</pallas_src>

<mosaic_0001>
module attributes {stable_mosaic.version = 11 : i64} {
  func.func @_drc_kernel(%arg0: i32, %arg1: memref<8x512xf32, #tpu.memory_space<vmem>>, %arg2: memref<8x512xf32, #tpu.memory_space<vmem>>) attributes {dimension_semantics = [#tpu.dimension_semantics<parallel>], iteration_bounds = array<i64: 1>, scalar_prefetch = 0 : i64, scratch_operands = 0 : i64, tpu.core_type = #tpu.core_type<tc>, window_params = [{transform_indices = @transform_0, window_bounds = array<i64: 8, 512>}, {transform_indices = @transform_1, window_bounds = array<i64: 8, 512>}]} {
    %c0 = arith.constant 0 : index
    %c0_0 = arith.constant 0 : index
    %0 = vector.load %arg1[%c0, %c0_0] : memref<8x512xf32, #tpu.memory_space<vmem>>, vector<8x512xf32>
    %cst = arith.constant 9.99999974E-6 : f32
    %1 = vector.broadcast %cst : f32 to vector<8x512xf32>
    %2 = arith.maximumf %0, %1 : vector<8x512xf32>
    %cst_1 = arith.constant 1.000000e+00 : f32
    %3 = vector.broadcast %cst_1 : f32 to vector<8x512xf32>
    %4 = arith.mulf %2, %3 : vector<8x512xf32>
    %5 = math.log %4 : vector<8x512xf32>
    %c0_2 = arith.constant 0 : index
    %c0_3 = arith.constant 0 : index
    %6 = vector.load %arg2[%c0_2, %c0_3] : memref<8x512xf32, #tpu.memory_space<vmem>>, vector<8x512xf32>
    tpu.vector_store %arg2[%c0_2, %c0_3], %5 {strides = array<i32>} : memref<8x512xf32, #tpu.memory_space<vmem>>, vector<8x512xf32>,
    return
  }
  func.func @transform_0(%arg0: i32) -> (i32, i32) {
    %c0_i32 = arith.constant 0 : i32
    %c0_i32_0 = arith.constant 0 : i32
    return %arg0, %c0_i32 : i32, i32
  }
  func.func @transform_1(%arg0: i32) -> (i32, i32) {
    %c0_i32 = arith.constant 0 : i32
    %c0_i32_0 = arith.constant 0 : i32
    return %arg0, %c0_i32 : i32, i32
  }
}

</mosaic_0001>

<llo_original>
// kernel: tpu_custom_call.1
$region0: #{tpu_custom_call.1}
  #allocation0 [shape = 'u32[]', space=smem, size = 0x4, offset = 0x4, fixed_abs, tag = 'smem constant byte address 0x4 - core index']
  #allocation1 [shape = 'u32[72,128]{1,0:T(1,128)}', space=vmem, size = 0x9000, scoped, tag = 'internal scratch']
  %s0 = inlined_call_operand.hbm [shape: f32[8,512], index: 0, kind: input, shape index: {}]
  %s1 = inlined_call_operand.hbm [shape: f32[8,512], index: 1, kind: output, shape index: {}]
  %s2 = sld [smem:[#allocation0]]
  $region18: #{tpu_custom_call.1} parent=0
    _
  %s4 = ssub.s32 1, %s2
  %s5 = scalar_select 0, %s4, %s2
  $region1: #{tpu_custom_call.1} parent=0
    #allocation2 [shape = 'u8[16384]{0}', space=vmem, size = 0x4000, scoped, tag = 'input window, operand 0, single buffered']
    #allocation3 [shape = 's32[1]{0}', space=sflag, size = 0x4, scoped, tag = 'scoped memory for tpu_custom_call.1']
    #allocation4 [shape = 's32[1]{0}', space=sflag, size = 0x4, scoped, tag = 'scoped memory for tpu_custom_call.1']
    #allocation5 [shape = 'u8[16384]{0}', space=vmem, size = 0x4000, scoped, tag = 'output window, operand 0, single buffered']
    %6 = vsyncpa [#allocation3], 0
    %7 = vsyncpa [#allocation4], 0
    // Predicated region
    $region2: #{tpu_custom_call.1} parent=1 // pred_check
      _
    $region3: #{tpu_custom_call.1} parent=1 // pred_check_branch
      %9 = sbr.rel (0) target = $region5
    $region4: #{tpu_custom_call.1} parent=1 // pred_region
      %11 = vsyncadd [#allocation3], 0
      %s13 = sshll.u32 %s0, 4
      %s14 = int_to_ptr.hbm [resolvable:$true] %s13
      %s15 = sshll.u32 [#allocation2], 4
      %s16 = int_to_ptr.vmem [resolvable:$true] %s15
      %18 = dma.hbm_to_vmem [thread:$0]  %s14, 512, %s16, [#allocation3]
    $region5: #{tpu_custom_call.1} parent=1 // pred_fallthru
      _
    // Predicated region
    $region6: #{tpu_custom_call.1} parent=1 // pred_check
      _
    $region7: #{tpu_custom_call.1} parent=1 // pred_check_branch
      %20 = sbr.rel (0) target = $region9
    $region8: #{tpu_custom_call.1} parent=1 // pred_region
      %22 = dma.done [#allocation3], 512
    $region9: #{tpu_custom_call.1} parent=1 // pred_fallthru
      _
    %v23 = vld [vmem:[#allocation2] sm:$0xff]
    %v24 = vld [vmem:[#allocation2 + $0x8] sm:$0xff]
    %v25 = vld [vmem:[#allocation2 + $0x10] sm:$0xff]
    %v26 = vld [vmem:[#allocation2 + $0x18] sm:$0xff]
    %v27 = vmax.f32 %v23, 1e-05
    %v28 = vmax.f32 %v24, 1e-05
    %v29 = vmax.f32 %v25, 1e-05
    %v30 = vmax.f32 %v26, 1e-05
    %v31 = vlog2.pop %v27
    %v32 = vmul.f32 %v31, 0.6931472
    %v33 = vlog2.pop %v28
    %v34 = vmul.f32 %v33, 0.6931472
    %v35 = vlog2.pop %v29
    %v36 = vmul.f32 %v35, 0.6931472
    %v37 = vlog2.pop %v30
    %v38 = vmul.f32 %v37, 0.6931472
    %39 = vst [vmem:[#allocation5] sm:$0xff] %v32
    %40 = vst [vmem:[#allocation5 + $0x8] sm:$0xff] %v34
    %41 = vst [vmem:[#allocation5 + $0x10] sm:$0xff] %v36
    %42 = vst [vmem:[#allocation5 + $0x18] sm:$0xff] %v38
    // Predicated region
    $region10: #{tpu_custom_call.1} parent=1 // pred_check
      _
    $region11: #{tpu_custom_call.1} parent=1 // pred_check_branch
      %44 = sbr.rel (0) target = $region13
    $region12: #{tpu_custom_call.1} parent=1 // pred_region
      %46 = vsyncadd [#allocation4], 0
      %s48 = sshll.u32 [#allocation5], 4
      %s49 = int_to_ptr.vmem [resolvable:$true] %s48
      %s50 = sshll.u32 %s1, 4
      %s51 = int_to_ptr.hbm [resolvable:$true] %s50
      %53 = dma.vmem_to_hbm [thread:$0]  %s49, 512, %s51, [#allocation4]
    $region13: #{tpu_custom_call.1} parent=1 // pred_fallthru
      _
    // Predicated region
    $region14: #{tpu_custom_call.1} parent=1 // pred_check
      _
    $region15: #{tpu_custom_call.1} parent=1 // pred_check_branch
      %55 = sbr.rel (0) target = $region17
    $region16: #{tpu_custom_call.1} parent=1 // pred_region
      %57 = dma.done [#allocation4], 512
    $region17: #{tpu_custom_call.1} parent=1 // pred_fallthru
      _
    %58 = vsyncpa [#allocation3], 1
    %59 = vsyncpa [#allocation4], 1

</llo_original>
